<compile_context>
chip_gen: v7x
topology: tpu7x:2x2x1
jax: 0.10.0
libtpu: 0.0.40
codegen_flags: <defaults>
</compile_context>

<pallas_src>
import functools

import jax
import jax.numpy as jnp
from jax.experimental import pallas as pl
from jax.experimental.pallas import tpu as pltpu


def _round_up(x, m):
    return (x + m - 1) // m * m


def _decoder_kernel(x_ref,
                    w1_ref, b1_ref, w2_ref, b2_ref,
                    w3_ref, b3_ref, w4_ref, b4_ref,
                    o_ref, *, slope):
    """Fused 4-layer MLP: (x @ W + b) -> LeakyReLU, four times, all in VMEM."""

    def layer(h, w_ref, b_ref):
        y = jnp.dot(h, w_ref[...], preferred_element_type=jnp.float32)  # MXU
        y = y + b_ref[...]                                              # (1, out) broadcast
        return jnp.maximum(y, jnp.float32(slope) * y)                   # LeakyReLU

    h = x_ref[...].astype(jnp.float32)
    h = layer(h, w1_ref, b1_ref)
    h = layer(h, w2_ref, b2_ref)
    h = layer(h, w3_ref, b3_ref)   # == Decoder.features (kept in-register, not stored)
    h = layer(h, w4_ref, b4_ref)
    o_ref[...] = h.astype(o_ref.dtype)


def decoder_forward(x, params, *, block_b=256):
    """x: (B, dec_in_features) -> (B, dec_out_features), eval-mode Decoder forward."""
    slope = params["slope"]
    layers = params["layers"]            # 4 x (w_pad:(in_p,out_p), b_pad:(1,out_p))
    dec_in = params["sizes"][0]
    dec_out = params["sizes"][-1]

    B = x.shape[0]
    in_pad = layers[0][0].shape[0]
    out_pad = layers[-1][0].shape[1]

    # Pad batch to a sublane multiple and features to lane-dense 128-wide slabs.
    bp = _round_up(max(B, 8), 8)
    bm = min(block_b, bp)
    bp = _round_up(bp, bm)
    xp = jnp.zeros((bp, in_pad), jnp.float32).at[:B, :dec_in].set(x.astype(jnp.float32))

    flat_params = [a for wb in layers for a in wb]
    kernel = functools.partial(_decoder_kernel, slope=slope)
    out_shape = jax.ShapeDtypeStruct((bp, out_pad), jnp.float32)

    if bp == bm:
        # Single block: no grid, no pipeline prologue / double buffering; everything in VMEM.
        out = pl.pallas_call(kernel, out_shape=out_shape)(xp, *flat_params)
    else:
        # Tile the batch; weights/biases are full-extent (VMEM-resident) blocks.
        param_specs = []
        for (w, b) in layers:
            param_specs.append(pl.BlockSpec(w.shape, lambda i: (0, 0)))
            param_specs.append(pl.BlockSpec(b.shape, lambda i: (0, 0)))
        out = pl.pallas_call(
            kernel,
            out_shape=out_shape,
            grid=(bp // bm,),
            in_specs=[pl.BlockSpec((bm, in_pad), lambda i: (i, 0))] + param_specs,
            out_specs=pl.BlockSpec((bm, out_pad), lambda i: (i, 0)),
            compiler_params=pltpu.CompilerParams(
                dimension_semantics=("parallel",),   # batch axis -> megacore-shardable
            ),
        )(xp, *flat_params)

    return out[:B, :dec_out]


def init_decoder_params(key, hparams):
    """Deterministic synthetic parameters matching the PyTorch Decoder's shapes."""
    sizes = [
        hparams["dec_in_features"],
        hparams["dec_hidden1_features"],
        hparams["dec_hidden2_features"],
        hparams["dec_hidden3_features"],
        hparams["dec_out_features"],
    ]
    slope = float(hparams["leaky_relu_slope"])

    layers, raw = [], []
    for idx in range(4):
        fin, fout = sizes[idx], sizes[idx + 1]
        key, kw, kb = jax.random.split(key, 3)
        # nn.Linear init: weight (out, in), bias (out,)
        bound = 1.0 / (fin ** 0.5)
        w = jax.random.uniform(kw, (fout, fin), jnp.float32, -bound, bound)
        b = jax.random.uniform(kb, (fout,), jnp.float32, -bound, bound)

        # WeightNorm: module stores g = ||w||_F, v = w / g and rebuilds
        # w_eff = v * (g / ||v||_F) every forward; fold it once here.
        g = jnp.sqrt(jnp.sum(w * w))
        v = w / g
        w_eff = v * (g / jnp.sqrt(jnp.sum(v * v)))

        raw.append((w_eff, b))

        # Zero-pad to lane-dense slabs and transpose to (in, out) so the kernel does x @ W.
        fin_p, fout_p = _round_up(fin, 128), _round_up(fout, 128)
        w_pad = jnp.zeros((fin_p, fout_p), jnp.float32).at[:fin, :fout].set(w_eff.T)
        b_pad = jnp.zeros((1, fout_p), jnp.float32).at[0, :fout].set(b)
        layers.append((w_pad, b_pad))

    return {"layers": layers, "raw": raw, "sizes": sizes, "slope": slope}


def decoder_reference(x, params):
    """Plain-JAX eval-mode reference (WeightNorm folded, Dropout = identity)."""
    slope = params["slope"]
    h = x
    for (w, b) in params["raw"]:
        y = h @ w.T + b
        h = jnp.where(y > 0, y, slope * y)
    return h


if __name__ == "__main__":
    key = jax.random.PRNGKey(0)
    kx, kp = jax.random.split(key)

    hparams = {
        "dec_in_features": 32,
        "dec_hidden1_features": 64,
        "dec_hidden2_features": 64,
        "dec_hidden3_features": 64,
        "dec_out_features": 16,
        "leaky_relu_slope": 0.2,
        "dropout_proba": 0.5,   # inference mode -> identity
    }
    batch = 8

    x = jax.random.normal(kx, (batch, hparams["dec_in_features"]), jnp.float32)
    params = init_decoder_params(kp, hparams)

    out = decoder_forward(x, params)
    out = jax.block_until_ready(out)

    ref = decoder_reference(x, params)
    assert out.shape == (batch, hparams["dec_out_features"])
    assert jnp.allclose(out, ref, atol=1e-4, rtol=1e-4), "mismatch vs reference"

    print("KERNEL_OK")
</pallas_src>

<mosaic_0001>
module attributes {stable_mosaic.version = 11 : i64} {
  func.func @_decoder_kernel(%arg0: memref<8x128xf32, #tpu.memory_space<vmem>>, %arg1: memref<128x128xf32, #tpu.memory_space<vmem>>, %arg2: memref<1x128xf32, #tpu.memory_space<vmem>>, %arg3: memref<128x128xf32, #tpu.memory_space<vmem>>, %arg4: memref<1x128xf32, #tpu.memory_space<vmem>>, %arg5: memref<128x128xf32, #tpu.memory_space<vmem>>, %arg6: memref<1x128xf32, #tpu.memory_space<vmem>>, %arg7: memref<128x128xf32, #tpu.memory_space<vmem>>, %arg8: memref<1x128xf32, #tpu.memory_space<vmem>>, %arg9: memref<8x128xf32, #tpu.memory_space<vmem>>) attributes {dimension_semantics = [], scalar_prefetch = 0 : i64, scratch_operands = 0 : i64, tpu.core_type = #tpu.core_type<tc>} {
    %c0 = arith.constant 0 : index
    %c0_0 = arith.constant 0 : index
    %0 = vector.load %arg0[%c0, %c0_0] : memref<8x128xf32, #tpu.memory_space<vmem>>, vector<8x128xf32>
    %c0_1 = arith.constant 0 : index
    %c0_2 = arith.constant 0 : index
    %1 = vector.load %arg1[%c0_1, %c0_2] : memref<128x128xf32, #tpu.memory_space<vmem>>, vector<128x128xf32>
    %cst = arith.constant dense<0.000000e+00> : vector<8x128xf32>
    %2 = tpu.matmul %0, %1, %cst {dimension_numbers = #tpu.dot_dimension_numbers<[1], [0], [0], [1], [0, 0, 1, 1], [], []>} : vector<8x128xf32>, vector<128x128xf32>, vector<8x128xf32> -> vector<8x128xf32>
    %c0_3 = arith.constant 0 : index
    %c0_4 = arith.constant 0 : index
    %3 = vector.load %arg2[%c0_3, %c0_4] : memref<1x128xf32, #tpu.memory_space<vmem>>, vector<1x128xf32>
    %4 = vector.broadcast %3 : vector<1x128xf32> to vector<8x128xf32>
    %5 = arith.addf %2, %4 : vector<8x128xf32>
    %cst_5 = arith.constant 2.000000e-01 : f32
    %6 = vector.broadcast %cst_5 : f32 to vector<8x128xf32>
    %7 = arith.mulf %6, %5 : vector<8x128xf32>
    %8 = arith.maximumf %5, %7 : vector<8x128xf32>
    %c0_6 = arith.constant 0 : index
    %c0_7 = arith.constant 0 : index
    %9 = vector.load %arg3[%c0_6, %c0_7] : memref<128x128xf32, #tpu.memory_space<vmem>>, vector<128x128xf32>
    %cst_8 = arith.constant dense<0.000000e+00> : vector<8x128xf32>
    %10 = tpu.matmul %8, %9, %cst_8 {dimension_numbers = #tpu.dot_dimension_numbers<[1], [0], [0], [1], [0, 0, 1, 1], [], []>} : vector<8x128xf32>, vector<128x128xf32>, vector<8x128xf32> -> vector<8x128xf32>
    %c0_9 = arith.constant 0 : index
    %c0_10 = arith.constant 0 : index
    %11 = vector.load %arg4[%c0_9, %c0_10] : memref<1x128xf32, #tpu.memory_space<vmem>>, vector<1x128xf32>
    %12 = vector.broadcast %11 : vector<1x128xf32> to vector<8x128xf32>
    %13 = arith.addf %10, %12 : vector<8x128xf32>
    %cst_11 = arith.constant 2.000000e-01 : f32
    %14 = vector.broadcast %cst_11 : f32 to vector<8x128xf32>
    %15 = arith.mulf %14, %13 : vector<8x128xf32>
    %16 = arith.maximumf %13, %15 : vector<8x128xf32>
    %c0_12 = arith.constant 0 : index
    %c0_13 = arith.constant 0 : index
    %17 = vector.load %arg5[%c0_12, %c0_13] : memref<128x128xf32, #tpu.memory_space<vmem>>, vector<128x128xf32>
    %cst_14 = arith.constant dense<0.000000e+00> : vector<8x128xf32>
    %18 = tpu.matmul %16, %17, %cst_14 {dimension_numbers = #tpu.dot_dimension_numbers<[1], [0], [0], [1], [0, 0, 1, 1], [], []>} : vector<8x128xf32>, vector<128x128xf32>, vector<8x128xf32> -> vector<8x128xf32>
    %c0_15 = arith.constant 0 : index
    %c0_16 = arith.constant 0 : index
    %19 = vector.load %arg6[%c0_15, %c0_16] : memref<1x128xf32, #tpu.memory_space<vmem>>, vector<1x128xf32>
    %20 = vector.broadcast %19 : vector<1x128xf32> to vector<8x128xf32>
    %21 = arith.addf %18, %20 : vector<8x128xf32>
    %cst_17 = arith.constant 2.000000e-01 : f32
    %22 = vector.broadcast %cst_17 : f32 to vector<8x128xf32>
    %23 = arith.mulf %22, %21 : vector<8x128xf32>
    %24 = arith.maximumf %21, %23 : vector<8x128xf32>
    %c0_18 = arith.constant 0 : index
    %c0_19 = arith.constant 0 : index
    %25 = vector.load %arg7[%c0_18, %c0_19] : memref<128x128xf32, #tpu.memory_space<vmem>>, vector<128x128xf32>
    %cst_20 = arith.constant dense<0.000000e+00> : vector<8x128xf32>
    %26 = tpu.matmul %24, %25, %cst_20 {dimension_numbers = #tpu.dot_dimension_numbers<[1], [0], [0], [1], [0, 0, 1, 1], [], []>} : vector<8x128xf32>, vector<128x128xf32>, vector<8x128xf32> -> vector<8x128xf32>
    %c0_21 = arith.constant 0 : index
    %c0_22 = arith.constant 0 : index
    %27 = vector.load %arg8[%c0_21, %c0_22] : memref<1x128xf32, #tpu.memory_space<vmem>>, vector<1x128xf32>
    %28 = vector.broadcast %27 : vector<1x128xf32> to vector<8x128xf32>
    %29 = arith.addf %26, %28 : vector<8x128xf32>
    %cst_23 = arith.constant 2.000000e-01 : f32
    %30 = vector.broadcast %cst_23 : f32 to vector<8x128xf32>
    %31 = arith.mulf %30, %29 : vector<8x128xf32>
    %32 = arith.maximumf %29, %31 : vector<8x128xf32>
    %c0_24 = arith.constant 0 : index
    %c0_25 = arith.constant 0 : index
    %33 = vector.load %arg9[%c0_24, %c0_25] : memref<8x128xf32, #tpu.memory_space<vmem>>, vector<8x128xf32>
    tpu.vector_store %arg9[%c0_24, %c0_25], %32 {strides = array<i32>} : memref<8x128xf32, #tpu.memory_space<vmem>>, vector<8x128xf32>,
    return
  }
}

</mosaic_0001>

<llo_original>
// kernel: tpu_custom_call.1
$region0: #{tpu_custom_call.1}
  #allocation0 [shape = 'u32[]', space=smem, size = 0x4, offset = 0x4, fixed_abs, tag = 'smem constant byte address 0x4 - core index']
  #allocation1 [shape = 'u32[144,128]{1,0:T(1,128)}', space=vmem, size = 0x12000, scoped, tag = 'internal scratch']
  %s0 = inlined_call_operand.hbm [shape: f32[8,128], index: 0, kind: input, shape index: {}]
  %s1 = inlined_call_operand.hbm [shape: f32[128,128], index: 1, kind: input, shape index: {}]
  %s2 = inlined_call_operand.vmem [shape: f32[1,128], index: 2, kind: input, shape index: {}]
  %s3 = inlined_call_operand.hbm [shape: f32[128,128], index: 3, kind: input, shape index: {}]
  %s4 = inlined_call_operand.vmem [shape: f32[1,128], index: 4, kind: input, shape index: {}]
  %s5 = inlined_call_operand.hbm [shape: f32[128,128], index: 5, kind: input, shape index: {}]
  %s6 = inlined_call_operand.vmem [shape: f32[1,128], index: 6, kind: input, shape index: {}]
  %s7 = inlined_call_operand.hbm [shape: f32[128,128], index: 7, kind: input, shape index: {}]
  %s8 = inlined_call_operand.vmem [shape: f32[1,128], index: 8, kind: input, shape index: {}]
  %s9 = inlined_call_operand.hbm [shape: f32[8,128], index: 9, kind: output, shape index: {}]
  %s10 = sld [smem:[#allocation0]]
  $region66: #{tpu_custom_call.1} parent=0
    _
  %s12 = ssub.s32 1, %s10
  %s13 = scalar_select 0, %s12, %s10
  $region1: #{tpu_custom_call.1} parent=0
    #allocation2 [shape = 'u8[4096]{0}', space=vmem, size = 0x1000, scoped, tag = 'input window, operand 0, single buffered']
    #allocation3 [shape = 's32[1]{0}', space=sflag, size = 0x4, scoped, tag = 'scoped memory for tpu_custom_call.1']
    #allocation4 [shape = 's32[1]{0}', space=sflag, size = 0x4, scoped, tag = 'scoped memory for tpu_custom_call.1']
    #allocation5 [shape = 'u8[65536]{0}', space=vmem, size = 0x10000, scoped, tag = 'input window, operand 1, single buffered']
    #allocation6 [shape = 's32[1]{0}', space=sflag, size = 0x4, scoped, tag = 'scoped memory for tpu_custom_call.1']
    #allocation7 [shape = 'u8[65536]{0}', space=vmem, size = 0x10000, scoped, tag = 'input window, operand 3, single buffered']
    #allocation8 [shape = 'u8[65536]{0}', space=vmem, size = 0x10000, scoped, tag = 'input window, operand 5, single buffered']
    #allocation9 [shape = 's32[1]{0}', space=sflag, size = 0x4, scoped, tag = 'scoped memory for tpu_custom_call.1']
    #allocation10 [shape = 'u8[65536]{0}', space=vmem, size = 0x10000, scoped, tag = 'input window, operand 7, single buffered']
    #allocation11 [shape = 'u8[4096]{0}', space=vmem, size = 0x1000, scoped, tag = 'output window, operand 0, single buffered']
    %14 = vsyncpa [#allocation3], 0
    %15 = vsyncpa [#allocation6], 0
    %16 = vsyncpa [#allocation9], 0
    %17 = vsyncpa [#allocation4], 0
    // Predicated region
    $region2: #{tpu_custom_call.1} parent=1 // pred_check
      _
    $region3: #{tpu_custom_call.1} parent=1 // pred_check_branch
      %19 = sbr.rel (0) target = $region5
    $region4: #{tpu_custom_call.1} parent=1 // pred_region
      %s21 = ssub.s32 128, 128
      %22 = vsyncadd [#allocation3], %s21
      %s24 = sshll.u32 [#allocation2], 4
      %s25 = int_to_ptr.vmem [resolvable:$true] %s24
      %27 = dma.hbm_to_vmem [thread:$0]  %s0, 128, %s25, [#allocation3]
    $region5: #{tpu_custom_call.1} parent=1 // pred_fallthru
      _
    // Predicated region
    $region6: #{tpu_custom_call.1} parent=1 // pred_check
      _
    $region7: #{tpu_custom_call.1} parent=1 // pred_check_branch
      %29 = sbr.rel (0) target = $region9
    $region8: #{tpu_custom_call.1} parent=1 // pred_region
      %s31 = ssub.s32 2048, 2048
      %32 = vsyncadd [#allocation6], %s31
      %s33 = sshll.u32 [#allocation5], 4
      %s34 = int_to_ptr.vmem [resolvable:$true] %s33
      %39 = dma.hbm_to_vmem [thread:$0]  %s1, 2048, %s34, [#allocation6], 128, 128, 8
    $region9: #{tpu_custom_call.1} parent=1 // pred_fallthru
      _
    // Predicated region
    $region10: #{tpu_custom_call.1} parent=1 // pred_check
      _
    $region11: #{tpu_custom_call.1} parent=1 // pred_check_branch
      %41 = sbr.rel (0) target = $region13
    $region12: #{tpu_custom_call.1} parent=1 // pred_region
      _
    $region13: #{tpu_custom_call.1} parent=1 // pred_fallthru
      _
    // Predicated region
    $region14: #{tpu_custom_call.1} parent=1 // pred_check
      _
    $region15: #{tpu_custom_call.1} parent=1 // pred_check_branch
      %43 = sbr.rel (0) target = $region17
    $region16: #{tpu_custom_call.1} parent=1 // pred_region
      %s45 = ssub.s32 2048, 2048
      %46 = vsyncadd [#allocation6], %s45
      %s47 = sshll.u32 [#allocation7], 4
      %s48 = int_to_ptr.vmem [resolvable:$true] %s47
      %53 = dma.hbm_to_vmem [thread:$0]  %s3, 2048, %s48, [#allocation6], 128, 128, 8
    $region17: #{tpu_custom_call.1} parent=1 // pred_fallthru
      _
    // Predicated region
    $region18: #{tpu_custom_call.1} parent=1 // pred_check
      _
    $region19: #{tpu_custom_call.1} parent=1 // pred_check_branch
      %55 = sbr.rel (0) target = $region21
    $region20: #{tpu_custom_call.1} parent=1 // pred_region
      _
    $region21: #{tpu_custom_call.1} parent=1 // pred_fallthru
      _
    // Predicated region
    $region22: #{tpu_custom_call.1} parent=1 // pred_check
      _
    $region23: #{tpu_custom_call.1} parent=1 // pred_check_branch
      %57 = sbr.rel (0) target = $region25
    $region24: #{tpu_custom_call.1} parent=1 // pred_region
      %s59 = ssub.s32 2048, 2048
      %60 = vsyncadd [#allocation9], %s59
      %s61 = sshll.u32 [#allocation8], 4
      %s62 = int_to_ptr.vmem [resolvable:$true] %s61
      %67 = dma.hbm_to_vmem [thread:$0]  %s5, 2048, %s62, [#allocation9], 128, 128, 8
    $region25: #{tpu_custom_call.1} parent=1 // pred_fallthru
      _
    // Predicated region
    $region26: #{tpu_custom_call.1} parent=1 // pred_check
      _
    $region27: #{tpu_custom_call.1} parent=1 // pred_check_branch
      %69 = sbr.rel (0) target = $region29
    $region28: #{tpu_custom_call.1} parent=1 // pred_region
      _
    $region29: #{tpu_custom_call.1} parent=1 // pred_fallthru
      _
    // Predicated region
    $region30: #{tpu_custom_call.1} parent=1 // pred_check
      _
    $region31: #{tpu_custom_call.1} parent=1 // pred_check_branch
      %71 = sbr.rel (0) target = $region33
    $region32: #{tpu_custom_call.1} parent=1 // pred_region
      %s73 = ssub.s32 2048, 2048
      %74 = vsyncadd [#allocation9], %s73
      %s75 = sshll.u32 [#allocation10], 4
      %s76 = int_to_ptr.vmem [resolvable:$true] %s75
      %81 = dma.hbm_to_vmem [thread:$0]  %s7, 2048, %s76, [#allocation9], 128, 128, 8
    $region33: #{tpu_custom_call.1} parent=1 // pred_fallthru
      _
    // Predicated region
    $region34: #{tpu_custom_call.1} parent=1 // pred_check
      _
    $region35: #{tpu_custom_call.1} parent=1 // pred_check_branch
      %83 = sbr.rel (0) target = $region37
    $region36: #{tpu_custom_call.1} parent=1 // pred_region
      _
    $region37: #{tpu_custom_call.1} parent=1 // pred_fallthru
      _
    // Predicated region
    $region38: #{tpu_custom_call.1} parent=1 // pred_check
      _
    $region39: #{tpu_custom_call.1} parent=1 // pred_check_branch
      %85 = sbr.rel (0) target = $region41
    $region40: #{tpu_custom_call.1} parent=1 // pred_region
      %86 = dma.done [#allocation3], 128
    $region41: #{tpu_custom_call.1} parent=1 // pred_fallthru
      _
    // Predicated region
    $region42: #{tpu_custom_call.1} parent=1 // pred_check
      _
    $region43: #{tpu_custom_call.1} parent=1 // pred_check_branch
      %88 = sbr.rel (0) target = $region45
    $region44: #{tpu_custom_call.1} parent=1 // pred_region
      %89 = dma.done [#allocation6], 2048
    $region45: #{tpu_custom_call.1} parent=1 // pred_fallthru
      _
    // Predicated region
    $region46: #{tpu_custom_call.1} parent=1 // pred_check
      _
    $region47: #{tpu_custom_call.1} parent=1 // pred_check_branch
      %91 = sbr.rel (0) target = $region49
    $region48: #{tpu_custom_call.1} parent=1 // pred_region
      %92 = dma.done [#allocation6], 2048
    $region49: #{tpu_custom_call.1} parent=1 // pred_fallthru
      _
    // Predicated region
    $region50: #{tpu_custom_call.1} parent=1 // pred_check
      _
    $region51: #{tpu_custom_call.1} parent=1 // pred_check_branch
      %94 = sbr.rel (0) target = $region53
    $region52: #{tpu_custom_call.1} parent=1 // pred_region
      %95 = dma.done [#allocation9], 2048
    $region53: #{tpu_custom_call.1} parent=1 // pred_fallthru
      _
    // Predicated region
    $region54: #{tpu_custom_call.1} parent=1 // pred_check
      _
    $region55: #{tpu_custom_call.1} parent=1 // pred_check_branch
      %97 = sbr.rel (0) target = $region57
    $region56: #{tpu_custom_call.1} parent=1 // pred_region
      %98 = dma.done [#allocation9], 2048
    $region57: #{tpu_custom_call.1} parent=1 // pred_fallthru
      _
    %v99 = vld [vmem:[#allocation2] sm:$0xff]
    %v100 = vld [vmem:[#allocation5] sm:$0xff]
    %v101 = vld [vmem:[#allocation5 + $0x8] sm:$0xff]
    %v102 = vld [vmem:[#allocation5 + $0x10] sm:$0xff]
    %v103 = vld [vmem:[#allocation5 + $0x18] sm:$0xff]
    %v104 = vld [vmem:[#allocation5 + $0x20] sm:$0xff]
    %v105 = vld [vmem:[#allocation5 + $0x28] sm:$0xff]
    %v106 = vld [vmem:[#allocation5 + $0x30] sm:$0xff]
    %v107 = vld [vmem:[#allocation5 + $0x38] sm:$0xff]
    %v108 = vld [vmem:[#allocation5 + $0x40] sm:$0xff]
    %v109 = vld [vmem:[#allocation5 + $0x48] sm:$0xff]
    %v110 = vld [vmem:[#allocation5 + $0x50] sm:$0xff]
    %v111 = vld [vmem:[#allocation5 + $0x58] sm:$0xff]
    %v112 = vld [vmem:[#allocation5 + $0x60] sm:$0xff]
    %v113 = vld [vmem:[#allocation5 + $0x68] sm:$0xff]
    %v114 = vld [vmem:[#allocation5 + $0x70] sm:$0xff]
    %v115 = vld [vmem:[#allocation5 + $0x78] sm:$0xff]
    %v116 = vld [vmem:[%s2] sm:$0x1]
    %v118 = vlaneseq
    %v119 = vshrl.u32 %v118, 7
    %v120 = vsub.s32 0, %v119
    %v121 = vrot.slane %v116, %v120
    %123 = vmatprep.subr.mxu0 0.0
    %124 = vmatpush1.msra.mxu0 %v100
    %125 = vmatprep.subr.mxu0 0.0
    %126 = vmatpush1.msra.mxu0 %v101
    %127 = vmatprep.subr.mxu0 0.0
    %128 = vmatpush1.msra.mxu0 %v102
    %129 = vmatprep.subr.mxu0 0.0
    %130 = vmatpush1.msra.mxu0 %v103
    %131 = vmatprep.subr.mxu0 0.0
    %132 = vmatpush1.msra.mxu0 %v104
    %133 = vmatprep.subr.mxu0 0.0
    %134 = vmatpush1.msra.mxu0 %v105
    %135 = vmatprep.subr.mxu0 0.0
    %136 = vmatpush1.msra.mxu0 %v106
    %137 = vmatprep.subr.mxu0 0.0
    %138 = vmatpush1.msra.mxu0 %v107
    %139 = vmatprep.subr.mxu0 0.0
    %140 = vmatpush1.msra.mxu0 %v108
    %141 = vmatprep.subr.mxu0 0.0
    %142 = vmatpush1.msra.mxu0 %v109
    %143 = vmatprep.subr.mxu0 0.0
    %144 = vmatpush1.msra.mxu0 %v110
    %145 = vmatprep.subr.mxu0 0.0
    %146 = vmatpush1.msra.mxu0 %v111
    %147 = vmatprep.subr.mxu0 0.0
    %148 = vmatpush1.msra.mxu0 %v112
    %149 = vmatprep.subr.mxu0 0.0
    %150 = vmatpush1.msra.mxu0 %v113
    %151 = vmatprep.subr.mxu0 0.0
    %152 = vmatpush1.msra.mxu0 %v114
    %153 = vmatprep.subr.mxu0 0.0
    %154 = vmatpush1.msra.mxu0 %v115
    %155 = vmatprep.subr.mxu0 0.0
    %156 = vmatpush1.msra.mxu0 0.0
    %157 = vmatprep.subr.mxu0 0.0
    %158 = vmatpush1.msra.mxu0 0.0
    %159 = vmatprep.subr.mxu0 0.0
    %160 = vmatpush1.msra.mxu0 0.0
    %161 = vmatprep.subr.mxu0 0.0
    %162 = vmatpush1.msra.mxu0 0.0
    %163 = vmatprep.subr.mxu0 0.0
    %164 = vmatpush1.msra.mxu0 0.0
    %165 = vmatprep.subr.mxu0 0.0
    %166 = vmatpush1.msra.mxu0 0.0
    %167 = vmatprep.subr.mxu0 0.0
    %168 = vmatpush1.msra.mxu0 0.0
    %169 = vmatprep.subr.mxu0 0.0
    %170 = vmatpush1.msra.mxu0 0.0
    %171 = vmatprep.subr.mxu0 0.0
    %172 = vmatpush1.msra.mxu0 0.0
    %173 = vmatprep.subr.mxu0 0.0
    %174 = vmatpush1.msra.mxu0 0.0
    %175 = vmatprep.subr.mxu0 0.0
    %176 = vmatpush1.msra.mxu0 0.0
    %177 = vmatprep.subr.mxu0 0.0
    %178 = vmatpush1.msra.mxu0 0.0
    %179 = vmatprep.subr.mxu0 0.0
    %180 = vmatpush1.msra.mxu0 0.0
    %181 = vmatprep.subr.mxu0 0.0
    %182 = vmatpush1.msra.mxu0 0.0
    %183 = vmatprep.subr.mxu0 0.0
    %184 = vmatpush1.msra.mxu0 0.0
    %185 = vmatprep.subr.mxu0 0.0
    %186 = vmatpush1.msra.mxu0 0.0
    %187 = vmatprep.mubr.f32.mxu0 0.0
    %188 = vmatmul.mubr.f32.gmra.mrb[0].mxu0 %v99
    %v189 = vpop.f32.mrb[0].mxu0
    %v190 = vadd.f32 %v121, %v189
    %v191 = vpop.f32.mrb[0].mxu0
    %192 = vdwg.mxu0
    %v193 = vmul.f32 %v190, 0.2
    %v194 = vmax.f32 %v190, %v193
    %v195 = vld [vmem:[#allocation7] sm:$0xff]
    %v196 = vld [vmem:[#allocation7 + $0x8] sm:$0xff]
    %v197 = vld [vmem:[#allocation7 + $0x10] sm:$0xff]
    %v198 = vld [vmem:[#allocation7 + $0x18] sm:$0xff]
    %v199 = vld [vmem:[#allocation7 + $0x20] sm:$0xff]
    %v200 = vld [vmem:[#allocation7 + $0x28] sm:$0xff]
    %v201 = vld [vmem:[#allocation7 + $0x30] sm:$0xff]
    %v202 = vld [vmem:[#allocation7 + $0x38] sm:$0xff]
    %v203 = vld [vmem:[#allocation7 + $0x40] sm:$0xff]
    %v204 = vld [vmem:[#allocation7 + $0x48] sm:$0xff]
    %v205 = vld [vmem:[#allocation7 + $0x50] sm:$0xff]
    %v206 = vld [vmem:[#allocation7 + $0x58] sm:$0xff]
    %v207 = vld [vmem:[#allocation7 + $0x60] sm:$0xff]
    %v208 = vld [vmem:[#allocation7 + $0x68] sm:$0xff]
    %v209 = vld [vmem:[#allocation7 + $0x70] sm:$0xff]
    %v210 = vld [vmem:[#allocation7 + $0x78] sm:$0xff]
    %v211 = vld [vmem:[%s4] sm:$0x1]
    %v213 = vlaneseq
    %v214 = vshrl.u32 %v213, 7
    %v215 = vsub.s32 0, %v214
    %v216 = vrot.slane %v211, %v215
    %218 = vmatprep.subr.mxu0 0.0
    %219 = vmatpush1.msra.mxu0 %v195
    %220 = vmatprep.subr.mxu0 0.0
    %221 = vmatpush1.msra.mxu0 %v196
    %222 = vmatprep.subr.mxu0 0.0
    %223 = vmatpush1.msra.mxu0 %v197
    %224 = vmatprep.subr.mxu0 0.0
    %225 = vmatpush1.msra.mxu0 %v198
    %226 = vmatprep.subr.mxu0 0.0
    %227 = vmatpush1.msra.mxu0 %v199
    %228 = vmatprep.subr.mxu0 0.0
    %229 = vmatpush1.msra.mxu0 %v200
    %230 = vmatprep.subr.mxu0 0.0
    %231 = vmatpush1.msra.mxu0 %v201
    %232 = vmatprep.subr.mxu0 0.0
    %233 = vmatpush1.msra.mxu0 %v202
    %234 = vmatprep.subr.mxu0 0.0
    %235 = vmatpush1.msra.mxu0 %v203
    %236 = vmatprep.subr.mxu0 0.0
    %237 = vmatpush1.msra.mxu0 %v204
    %238 = vmatprep.subr.mxu0 0.0
    %239 = vmatpush1.msra.mxu0 %v205
    %240 = vmatprep.subr.mxu0 0.0
    %241 = vmatpush1.msra.mxu0 %v206
    %242 = vmatprep.subr.mxu0 0.0
    %243 = vmatpush1.msra.mxu0 %v207
    %244 = vmatprep.subr.mxu0 0.0
    %245 = vmatpush1.msra.mxu0 %v208
    %246 = vmatprep.subr.mxu0 0.0
    %247 = vmatpush1.msra.mxu0 %v209
    %248 = vmatprep.subr.mxu0 0.0
    %249 = vmatpush1.msra.mxu0 %v210
    %250 = vmatprep.subr.mxu0 0.0
    %251 = vmatpush1.msra.mxu0 0.0
    %252 = vmatprep.subr.mxu0 0.0
    %253 = vmatpush1.msra.mxu0 0.0
    %254 = vmatprep.subr.mxu0 0.0
    %255 = vmatpush1.msra.mxu0 0.0
    %256 = vmatprep.subr.mxu0 0.0
    %257 = vmatpush1.msra.mxu0 0.0
    %258 = vmatprep.subr.mxu0 0.0
    %259 = vmatpush1.msra.mxu0 0.0
    %260 = vmatprep.subr.mxu0 0.0
    %261 = vmatpush1.msra.mxu0 0.0
    %262 = vmatprep.subr.mxu0 0.0
    %263 = vmatpush1.msra.mxu0 0.0
    %264 = vmatprep.subr.mxu0 0.0
    %265 = vmatpush1.msra.mxu0 0.0
    %266 = vmatprep.subr.mxu0 0.0
    %267 = vmatpush1.msra.mxu0 0.0
    %268 = vmatprep.subr.mxu0 0.0
    %269 = vmatpush1.msra.mxu0 0.0
    %270 = vmatprep.subr.mxu0 0.0
    %271 = vmatpush1.msra.mxu0 0.0
    %272 = vmatprep.subr.mxu0 0.0
    %273 = vmatpush1.msra.mxu0 0.0
    %274 = vmatprep.subr.mxu0 0.0
    %275 = vmatpush1.msra.mxu0 0.0
    %276 = vmatprep.subr.mxu0 0.0
    %277 = vmatpush1.msra.mxu0 0.0
    %278 = vmatprep.subr.mxu0 0.0
    %279 = vmatpush1.msra.mxu0 0.0
    %280 = vmatprep.subr.mxu0 0.0
    %281 = vmatpush1.msra.mxu0 0.0
    %282 = vmatprep.mubr.f32.mxu0 0.0
    %283 = vmatmul.mubr.f32.gmra.mrb[0].mxu0 %v194
    %v284 = vpop.f32.mrb[0].mxu0
    %v285 = vadd.f32 %v216, %v284
    %v286 = vpop.f32.mrb[0].mxu0
    %287 = vdwg.mxu0
    %v288 = vmul.f32 %v285, 0.2
    %v289 = vmax.f32 %v285, %v288
    %v290 = vld [vmem:[#allocation8] sm:$0xff]
    %v291 = vld [vmem:[#allocation8 + $0x8] sm:$0xff]
    %v292 = vld [vmem:[#allocation8 + $0x10] sm:$0xff]
    %v293 = vld [vmem:[#allocation8 + $0x18] sm:$0xff]
    %v294 = vld [vmem:[#allocation8 + $0x20] sm:$0xff]
    %v295 = vld [vmem:[#allocation8 + $0x28] sm:$0xff]
    %v296 = vld [vmem:[#allocation8 + $0x30] sm:$0xff]
    %v297 = vld [vmem:[#allocation8 + $0x38] sm:$0xff]
    %v298 = vld [vmem:[#allocation8 + $0x40] sm:$0xff]
    %v299 = vld [vmem:[#allocation8 + $0x48] sm:$0xff]
    %v300 = vld [vmem:[#allocation8 + $0x50] sm:$0xff]
    %v301 = vld [vmem:[#allocation8 + $0x58] sm:$0xff]
    %v302 = vld [vmem:[#allocation8 + $0x60] sm:$0xff]
    %v303 = vld [vmem:[#allocation8 + $0x68] sm:$0xff]
    %v304 = vld [vmem:[#allocation8 + $0x70] sm:$0xff]
    %v305 = vld [vmem:[#allocation8 + $0x78] sm:$0xff]
    %v306 = vld [vmem:[%s6] sm:$0x1]
    %v308 = vlaneseq
    %v309 = vshrl.u32 %v308, 7
    %v310 = vsub.s32 0, %v309
    %v311 = vrot.slane %v306, %v310
    %313 = vmatprep.subr.mxu0 0.0
    %314 = vmatpush1.msra.mxu0 %v290
    %315 = vmatprep.subr.mxu0 0.0
    %316 = vmatpush1.msra.mxu0 %v291
    %317 = vmatprep.subr.mxu0 0.0
    %318 = vmatpush1.msra.mxu0 %v292
    %319 = vmatprep.subr.mxu0 0.0
    %320 = vmatpush1.msra.mxu0 %v293
    %321 = vmatprep.subr.mxu0 0.0
    %322 = vmatpush1.msra.mxu0 %v294
    %323 = vmatprep.subr.mxu0 0.0
    %324 = vmatpush1.msra.mxu0 %v295
    %325 = vmatprep.subr.mxu0 0.0
    %326 = vmatpush1.msra.mxu0 %v296
    %327 = vmatprep.subr.mxu0 0.0
    %328 = vmatpush1.msra.mxu0 %v297
    %329 = vmatprep.subr.mxu0 0.0
    %330 = vmatpush1.msra.mxu0 %v298
    %331 = vmatprep.subr.mxu0 0.0
    %332 = vmatpush1.msra.mxu0 %v299
    %333 = vmatprep.subr.mxu0 0.0
    %334 = vmatpush1.msra.mxu0 %v300
    %335 = vmatprep.subr.mxu0 0.0
    %336 = vmatpush1.msra.mxu0 %v301
    %337 = vmatprep.subr.mxu0 0.0
    %338 = vmatpush1.msra.mxu0 %v302
    %339 = vmatprep.subr.mxu0 0.0
    %340 = vmatpush1.msra.mxu0 %v303
    %341 = vmatprep.subr.mxu0 0.0
    %342 = vmatpush1.msra.mxu0 %v304
    %343 = vmatprep.subr.mxu0 0.0
    %344 = vmatpush1.msra.mxu0 %v305
    %345 = vmatprep.subr.mxu0 0.0
    %346 = vmatpush1.msra.mxu0 0.0
    %347 = vmatprep.subr.mxu0 0.0
    %348 = vmatpush1.msra.mxu0 0.0
    %349 = vmatprep.subr.mxu0 0.0
    %350 = vmatpush1.msra.mxu0 0.0
    %351 = vmatprep.subr.mxu0 0.0
    %352 = vmatpush1.msra.mxu0 0.0
    %353 = vmatprep.subr.mxu0 0.0
    %354 = vmatpush1.msra.mxu0 0.0
    %355 = vmatprep.subr.mxu0 0.0
    %356 = vmatpush1.msra.mxu0 0.0
    %357 = vmatprep.subr.mxu0 0.0
    %358 = vmatpush1.msra.mxu0 0.0
    %359 = vmatprep.subr.mxu0 0.0
    %360 = vmatpush1.msra.mxu0 0.0
    %361 = vmatprep.subr.mxu0 0.0
    %362 = vmatpush1.msra.mxu0 0.0
    %363 = vmatprep.subr.mxu0 0.0
    %364 = vmatpush1.msra.mxu0 0.0
    %365 = vmatprep.subr.mxu0 0.0
    %366 = vmatpush1.msra.mxu0 0.0
    %367 = vmatprep.subr.mxu0 0.0
    %368 = vmatpush1.msra.mxu0 0.0
    %369 = vmatprep.subr.mxu0 0.0
    %370 = vmatpush1.msra.mxu0 0.0
    %371 = vmatprep.subr.mxu0 0.0
    %372 = vmatpush1.msra.mxu0 0.0
    %373 = vmatprep.subr.mxu0 0.0
    %374 = vmatpush1.msra.mxu0 0.0
    %375 = vmatprep.subr.mxu0 0.0
    %376 = vmatpush1.msra.mxu0 0.0
    %377 = vmatprep.mubr.f32.mxu0 0.0
    %378 = vmatmul.mubr.f32.gmra.mrb[0].mxu0 %v289
    %v379 = vpop.f32.mrb[0].mxu0
    %v380 = vadd.f32 %v311, %v379
    %v381 = vpop.f32.mrb[0].mxu0
    %382 = vdwg.mxu0
    %v383 = vmul.f32 %v380, 0.2
    %v384 = vmax.f32 %v380, %v383
    %v385 = vld [vmem:[#allocation10] sm:$0xff]
    %v386 = vld [vmem:[#allocation10 + $0x8] sm:$0xff]
    %v387 = vld [vmem:[#allocation10 + $0x10] sm:$0xff]
    %v388 = vld [vmem:[#allocation10 + $0x18] sm:$0xff]
    %v389 = vld [vmem:[#allocation10 + $0x20] sm:$0xff]
    %v390 = vld [vmem:[#allocation10 + $0x28] sm:$0xff]
    %v391 = vld [vmem:[#allocation10 + $0x30] sm:$0xff]
    %v392 = vld [vmem:[#allocation10 + $0x38] sm:$0xff]
    %v393 = vld [vmem:[#allocation10 + $0x40] sm:$0xff]
    %v394 = vld [vmem:[#allocation10 + $0x48] sm:$0xff]
    %v395 = vld [vmem:[#allocation10 + $0x50] sm:$0xff]
    %v396 = vld [vmem:[#allocation10 + $0x58] sm:$0xff]
    %v397 = vld [vmem:[#allocation10 + $0x60] sm:$0xff]
    %v398 = vld [vmem:[#allocation10 + $0x68] sm:$0xff]
    %v399 = vld [vmem:[#allocation10 + $0x70] sm:$0xff]
    %v400 = vld [vmem:[#allocation10 + $0x78] sm:$0xff]
    %v401 = vld [vmem:[%s8] sm:$0x1]
    %v403 = vlaneseq
    %v404 = vshrl.u32 %v403, 7
    %v405 = vsub.s32 0, %v404
    %v406 = vrot.slane %v401, %v405
    %408 = vmatprep.subr.mxu0 0.0
    %409 = vmatpush1.msra.mxu0 %v385
    %410 = vmatprep.subr.mxu0 0.0
    %411 = vmatpush1.msra.mxu0 %v386
    %412 = vmatprep.subr.mxu0 0.0
    %413 = vmatpush1.msra.mxu0 %v387
    %414 = vmatprep.subr.mxu0 0.0
    %415 = vmatpush1.msra.mxu0 %v388
    %416 = vmatprep.subr.mxu0 0.0
    %417 = vmatpush1.msra.mxu0 %v389
    %418 = vmatprep.subr.mxu0 0.0
    %419 = vmatpush1.msra.mxu0 %v390
    %420 = vmatprep.subr.mxu0 0.0
    %421 = vmatpush1.msra.mxu0 %v391
    %422 = vmatprep.subr.mxu0 0.0
    %423 = vmatpush1.msra.mxu0 %v392
    %424 = vmatprep.subr.mxu0 0.0
    %425 = vmatpush1.msra.mxu0 %v393
    %426 = vmatprep.subr.mxu0 0.0
    %427 = vmatpush1.msra.mxu0 %v394
    %428 = vmatprep.subr.mxu0 0.0
    %429 = vmatpush1.msra.mxu0 %v395
    %430 = vmatprep.subr.mxu0 0.0
    %431 = vmatpush1.msra.mxu0 %v396
    %432 = vmatprep.subr.mxu0 0.0
    %433 = vmatpush1.msra.mxu0 %v397
    %434 = vmatprep.subr.mxu0 0.0
    %435 = vmatpush1.msra.mxu0 %v398
    %436 = vmatprep.subr.mxu0 0.0
    %437 = vmatpush1.msra.mxu0 %v399
    %438 = vmatprep.subr.mxu0 0.0
    %439 = vmatpush1.msra.mxu0 %v400
    %440 = vmatprep.subr.mxu0 0.0
    %441 = vmatpush1.msra.mxu0 0.0
    %442 = vmatprep.subr.mxu0 0.0
    %443 = vmatpush1.msra.mxu0 0.0
    %444 = vmatprep.subr.mxu0 0.0
    %445 = vmatpush1.msra.mxu0 0.0
    %446 = vmatprep.subr.mxu0 0.0
    %447 = vmatpush1.msra.mxu0 0.0
    %448 = vmatprep.subr.mxu0 0.0
    %449 = vmatpush1.msra.mxu0 0.0
    %450 = vmatprep.subr.mxu0 0.0
    %451 = vmatpush1.msra.mxu0 0.0
    %452 = vmatprep.subr.mxu0 0.0
    %453 = vmatpush1.msra.mxu0 0.0
    %454 = vmatprep.subr.mxu0 0.0
    %455 = vmatpush1.msra.mxu0 0.0
    %456 = vmatprep.subr.mxu0 0.0
    %457 = vmatpush1.msra.mxu0 0.0
    %458 = vmatprep.subr.mxu0 0.0
    %459 = vmatpush1.msra.mxu0 0.0
    %460 = vmatprep.subr.mxu0 0.0
    %461 = vmatpush1.msra.mxu0 0.0
    %462 = vmatprep.subr.mxu0 0.0
    %463 = vmatpush1.msra.mxu0 0.0
    %464 = vmatprep.subr.mxu0 0.0
    %465 = vmatpush1.msra.mxu0 0.0
    %466 = vmatprep.subr.mxu0 0.0
    %467 = vmatpush1.msra.mxu0 0.0
    %468 = vmatprep.subr.mxu0 0.0
    %469 = vmatpush1.msra.mxu0 0.0
    %470 = vmatprep.subr.mxu0 0.0
    %471 = vmatpush1.msra.mxu0 0.0
    %472 = vmatprep.mubr.f32.mxu0 0.0
    %473 = vmatmul.mubr.f32.gmra.mrb[0].mxu0 %v384
    %v474 = vpop.f32.mrb[0].mxu0
    %v475 = vadd.f32 %v406, %v474
    %v476 = vpop.f32.mrb[0].mxu0
    %477 = vdwg.mxu0
    %v478 = vmul.f32 %v475, 0.2
    %v479 = vmax.f32 %v475, %v478
    %480 = vst [vmem:[#allocation11] sm:$0xff] %v479
    // Predicated region
    $region58: #{tpu_custom_call.1} parent=1 // pred_check
      _
    $region59: #{tpu_custom_call.1} parent=1 // pred_check_branch
      %482 = sbr.rel (0) target = $region61
    $region60: #{tpu_custom_call.1} parent=1 // pred_region
      %s484 = ssub.s32 128, 128
      %485 = vsyncadd [#allocation4], %s484
      %s487 = sshll.u32 [#allocation11], 4
      %s488 = int_to_ptr.vmem [resolvable:$true] %s487
      %490 = dma.vmem_to_hbm [thread:$0]  %s488, 128, %s9, [#allocation4]
    $region61: #{tpu_custom_call.1} parent=1 // pred_fallthru
      _
    // Predicated region
    $region62: #{tpu_custom_call.1} parent=1 // pred_check
      _
    $region63: #{tpu_custom_call.1} parent=1 // pred_check_branch
      %492 = sbr.rel (0) target = $region65
    $region64: #{tpu_custom_call.1} parent=1 // pred_region
      %493 = dma.done [#allocation4], 128
    $region65: #{tpu_custom_call.1} parent=1 // pred_fallthru
      _
    %494 = vsyncpa [#allocation3], 1
    %495 = vsyncpa [#allocation6], 1
    %496 = vsyncpa [#allocation9], 1
    %497 = vsyncpa [#allocation4], 1

</llo_original>
